<compile_context>
chip_gen: v5e
topology: v5e:2x2
jax: 0.10.0
libtpu: 0.0.40
codegen_flags: <defaults>
</compile_context>

<pallas_src>
import functools

import jax
import jax.numpy as jnp
from jax.experimental import pallas as pl
from jax.experimental.pallas import tpu as pltpu


_LANE = 128
_SUBLANE = 8


def _round_up(x: int, m: int) -> int:
    return (x + m - 1) // m * m


def _vmem_budget_and_limit():
    """Generation-aware VMEM plan: (tiler budget, compiler scoped-VMEM limit) in bytes."""
    try:
        cap = int(pltpu.get_tpu_info().vmem_capacity_bytes)   # ~128 MiB v5e/v6e, ~64 MiB v7x
    except Exception:
        cap = 64 << 20                                        # conservative (v7x-sized) fallback
    budget = (cap * 3) // 4                                   # what the tiler plans against
    limit = min(cap, budget + (4 << 20))                      # small headroom over the plan
    return budget, limit


# -----------------------------------------------------------------------------
# Kernel: entire MLP for one batch tile.
#   refs = (x_ref, w0_ref, b0_ref, w1_ref, b1_ref, ..., o_ref)
#   wK_ref is (k_dim, n_dim) -- already transposed; hidden n_dims lane-padded to 128.
# Padded hidden lanes see sigmoid(0) = 0.5, but the next layer's padded weight ROWS are
# zero, so they contribute nothing; the final layer's N is unpadded (== out_dim).
# -----------------------------------------------------------------------------
def _mlp_kernel(*refs, n_layers: int):
    x_ref = refs[0]
    o_ref = refs[1 + 2 * n_layers]

    h = x_ref[...]
    for i in range(n_layers):
        w_ref = refs[1 + 2 * i]
        b_ref = refs[2 + 2 * i]
        # MXU matmul with f32 accumulation regardless of operand dtype.
        h = jnp.dot(h.astype(w_ref.dtype), w_ref[...],
                    preferred_element_type=jnp.float32)
        h = h + b_ref[...].astype(jnp.float32)        # bias add in f32 (VPU)
        if i < n_layers - 1:
            h = jax.nn.sigmoid(h)                     # exp on EUP, f32 epilogue
    o_ref[...] = h.astype(o_ref.dtype)


# -----------------------------------------------------------------------------
# Parameters (torch.nn.Linear layout at init; transposed/padded once afterwards).
# -----------------------------------------------------------------------------
def init_mlp_params(key, input_dim, hidden_sizes, out_dim):
    """W is (out, in) like torch.nn.Linear, xavier-normal; b zeros."""
    sizes = [input_dim] + list(hidden_sizes) + [out_dim]
    params = []
    for idx in range(len(sizes) - 1):
        d_in, d_out = sizes[idx], sizes[idx + 1]
        key, wk = jax.random.split(key)
        std = (2.0 / (d_in + d_out)) ** 0.5
        w = std * jax.random.normal(wk, (d_out, d_in), dtype=jnp.float32)
        b = jnp.zeros((d_out,), dtype=jnp.float32)
        params.append((w, b))
    return params


def prepare_mlp_params(params, compute_dtype=jnp.float32):
    """One-time packing.

    * W (out,in) -> W^T (k,n); matmul operands cast to compute_dtype (bias stays f32).
    * Hidden widths are zero-padded to 128-lane multiples (lane-dense MXU passes);
      the first layer's K (= input_dim) and the final layer's N (= out_dim) are left
      UNPADDED so x can be passed as-is and the output needs no lane slice.

    CORRECTNESS NOTE: the padding trick relies on (a) padded K rows being exactly zero
    and (b) padded bias lanes being zero, so that sigmoid(0)=0.5 from padded hidden
    lanes is annihilated by the next layer's zero rows.  Do not change the pad values
    or the activation without revisiting this.

    For best accuracy with compute_dtype=bfloat16, note that activations are also
    down-cast to bf16 before each matmul (rounding compounds with depth); acceptable
    for inference, keep f32 if accuracy matters.
    """
    n = len(params)
    layers = []
    for idx, (w, b) in enumerate(params):
        d_out, d_in = w.shape
        k_pad = d_in if idx == 0 else _round_up(d_in, _LANE)          # matches prev layer's N
        n_pad = d_out if idx == n - 1 else _round_up(d_out, _LANE)    # final N stays == out_dim
        w_t = jnp.zeros((k_pad, n_pad), compute_dtype)
        w_t = w_t.at[:d_in, :d_out].set(w.T.astype(compute_dtype))
        b_p = jnp.zeros((1, n_pad), jnp.float32).at[:, :d_out].set(b.astype(jnp.float32))
        layers.append((w_t, b_p))
    return {
        "layers": layers,
        "in_dim": params[0][0].shape[1],
        "out_dim": params[-1][0].shape[0],
        "compute_dtype": compute_dtype,
    }


def mlp_forward(x, prepared, *, tile_m=None):
    """Fused MLP forward: y = Linear_n(sigmoid(...sigmoid(Linear_0(x))...))."""
    layers = prepared["layers"]
    cdtype = prepared["compute_dtype"]
    n_layers = len(layers)

    batch, d_in = x.shape
    assert d_in == layers[0][0].shape[0], "input feature dim mismatch"
    out_width = layers[-1][0].shape[1]          # == out_dim (unpadded)
    widths = [w.shape[1] for w, _ in layers]

    vmem_budget, vmem_limit = _vmem_budget_and_limit()

    # Weight stack is VMEM-resident and single-buffered (pl.Buffered(1) below).
    weights_bytes = sum(int(w.size) * w.dtype.itemsize + int(b.size) * b.dtype.itemsize
                        for w, b in layers)

    batch_p8 = _round_up(batch, _SUBLANE)

    # Per-row VMEM working set: double-buffered x / out tiles plus a conservative
    # estimate for per-layer f32 intermediates and compute-dtype cast copies.
    op_item = jnp.dtype(cdtype).itemsize
    x_item = x.dtype.itemsize
    per_row = (2 * d_in * x_item
               + 2 * out_width * x_item
               + (d_in + sum(widths)) * 4
               + (d_in + sum(widths)) * op_item)
    avail = vmem_budget - weights_bytes - (1 << 20)
    if avail < per_row * _SUBLANE:
        # TODO(synk): stream oversized layer weights in K/N tiles via pltpu.emit_pipeline
        # (memory_space=pl.ANY input + double-buffered VMEM scratch) instead of requiring
        # full weight residency.
        raise ValueError("MLP weight stack does not fit the per-core VMEM budget; "
                         "weight streaming is not implemented.")
    cap = max(_SUBLANE, min(1024, (avail // per_row) // _SUBLANE * _SUBLANE))

    if tile_m is None:
        # Keep >= 2 grid steps when the batch allows it so the "parallel" axis can
        # split across v7x's two TensorCores (negligible cost on single-TC chips).
        if batch_p8 >= 2 * _SUBLANE:
            cap = min(cap, max(_SUBLANE, (batch_p8 // 2) // _SUBLANE * _SUBLANE))
        cap = min(cap, batch_p8)
        # Prefer the largest multiple-of-8 tile that divides the 8-rounded batch
        # (avoids any wrapper-side row-padding pass over x).
        tile_m = _SUBLANE
        for t in range(cap, _SUBLANE - 1, -_SUBLANE):
            if batch_p8 % t == 0:
                tile_m = t
                break
        if tile_m * 4 < cap and tile_m < 128:
            tile_m = cap          # dividing tile is too small; pad rows instead
    else:
        tile_m = max(_SUBLANE, min(_round_up(tile_m, _SUBLANE), cap))

    batch_p = _round_up(batch, tile_m)
    x_in = x if batch_p == batch else jnp.pad(x, ((0, batch_p - batch), (0, 0)))

    in_specs = [pl.BlockSpec((tile_m, d_in), lambda i: (i, 0))]
    args = [x_in]
    const_map = lambda i: (0, 0)
    for w_t, b_p in layers:
        # Constant index_map + single buffering: weights/bias stay VMEM-resident across
        # batch tiles without paying the default 2x double-buffer cost.
        in_specs.append(pl.BlockSpec(w_t.shape, const_map, pipeline_mode=pl.Buffered(1)))
        in_specs.append(pl.BlockSpec(b_p.shape, const_map, pipeline_mode=pl.Buffered(1)))
        args += [w_t, b_p]

    out = pl.pallas_call(
        functools.partial(_mlp_kernel, n_layers=n_layers),
        out_shape=jax.ShapeDtypeStruct((batch_p, out_width), x.dtype),
        grid_spec=pltpu.PrefetchScalarGridSpec(
            num_scalar_prefetch=0,
            grid=(batch_p // tile_m,),
            in_specs=in_specs,
            out_specs=pl.BlockSpec((tile_m, out_width), lambda i: (i, 0)),
        ),
        compiler_params=pltpu.CompilerParams(
            dimension_semantics=("parallel",),        # independent batch tiles
            vmem_limit_bytes=int(vmem_limit),         # matches the tiler's budget
        ),
    )(*args)

    return out if batch_p == batch else out[:batch]


def mlp_reference(x, params):
    n = len(params)
    for i, (w, b) in enumerate(params):
        x = x @ w.T + b
        if i != n - 1:
            x = jax.nn.sigmoid(x)
    return x


if __name__ == "__main__":
    key = jax.random.PRNGKey(0)
    batch, input_dim, hidden_sizes, out_dim = 8, 32, [64, 32], 16

    pk, xk, xk2 = jax.random.split(key, 3)
    params = init_mlp_params(pk, input_dim, hidden_sizes, out_dim)
    x = jax.random.normal(xk, (batch, input_dim), dtype=jnp.float32)

    # f32 path: exact semantics of the torch module.
    prepared_f32 = prepare_mlp_params(params, compute_dtype=jnp.float32)
    fwd_f32 = jax.jit(lambda xx: mlp_forward(xx, prepared_f32))
    out = jax.block_until_ready(fwd_f32(x))
    ref = mlp_reference(x, params)
    assert out.shape == (batch, out_dim), out.shape
    assert jnp.allclose(out, ref, atol=1e-5, rtol=1e-5), "f32 mismatch vs reference"

    # Multi-tile grid, explicit tile override (forces row padding path).
    x_big = jax.random.normal(xk2, (1000, input_dim), dtype=jnp.float32)
    ref_big = mlp_reference(x_big, params)
    out_big = jax.block_until_ready(
        jax.jit(lambda xx: mlp_forward(xx, prepared_f32, tile_m=256))(x_big))
    assert out_big.shape == (1000, out_dim), out_big.shape
    assert jnp.allclose(out_big, ref_big, atol=1e-5, rtol=1e-5), "tiled mismatch"

    # Auto tile selection (batch-dividing tile, no padding, >=2 grid steps).
    out_big2 = jax.block_until_ready(
        jax.jit(lambda xx: mlp_forward(xx, prepared_f32))(x_big))
    assert out_big2.shape == (1000, out_dim), out_big2.shape
    assert jnp.allclose(out_big2, ref_big, atol=1e-5, rtol=1e-5), "auto-tile mismatch"

    # bf16 operands with f32 accumulation (perf-recommended dtype on v6e/v7x).
    prepared_bf16 = prepare_mlp_params(params, compute_dtype=jnp.bfloat16)
    out_bf16 = jax.block_until_ready(
        jax.jit(lambda xx: mlp_forward(xx, prepared_bf16))(x))
    assert jnp.allclose(out_bf16, ref, atol=1e-1, rtol=1e-1), "bf16 mismatch"

    print("KERNEL_OK")
</pallas_src>

<mosaic_0001>
module attributes {stable_mosaic.version = 11 : i64} {
  func.func @_mlp_kernel(%arg0: i32, %arg1: memref<8x32xf32, #tpu.memory_space<vmem>>, %arg2: memref<32x128xf32, #tpu.memory_space<vmem>>, %arg3: memref<1x128xf32, #tpu.memory_space<vmem>>, %arg4: memref<128x128xf32, #tpu.memory_space<vmem>>, %arg5: memref<1x128xf32, #tpu.memory_space<vmem>>, %arg6: memref<128x16xf32, #tpu.memory_space<vmem>>, %arg7: memref<1x16xf32, #tpu.memory_space<vmem>>, %arg8: memref<8x16xf32, #tpu.memory_space<vmem>>) attributes {dimension_semantics = [#tpu.dimension_semantics<parallel>], iteration_bounds = array<i64: 1>, scalar_prefetch = 0 : i64, scratch_operands = 0 : i64, tpu.core_type = #tpu.core_type<tc>, window_params = [{transform_indices = @transform_0, window_bounds = array<i64: 8, 32>}, {pipeline_mode = #tpu.pipeline_mode<synchronous>, transform_indices = @transform_1, window_bounds = array<i64: 32, 128>}, {pipeline_mode = #tpu.pipeline_mode<synchronous>, transform_indices = @transform_2, window_bounds = array<i64: 1, 128>}, {pipeline_mode = #tpu.pipeline_mode<synchronous>, transform_indices = @transform_3, window_bounds = array<i64: 128, 128>}, {pipeline_mode = #tpu.pipeline_mode<synchronous>, transform_indices = @transform_4, window_bounds = array<i64: 1, 128>}, {pipeline_mode = #tpu.pipeline_mode<synchronous>, transform_indices = @transform_5, window_bounds = array<i64: 128, 16>}, {pipeline_mode = #tpu.pipeline_mode<synchronous>, transform_indices = @transform_6, window_bounds = array<i64: 1, 16>}, {transform_indices = @transform_7, window_bounds = array<i64: 8, 16>}]} {
    %c0 = arith.constant 0 : index
    %c0_0 = arith.constant 0 : index
    %0 = vector.load %arg1[%c0, %c0_0] : memref<8x32xf32, #tpu.memory_space<vmem>>, vector<8x32xf32>
    %c0_1 = arith.constant 0 : index
    %c0_2 = arith.constant 0 : index
    %1 = vector.load %arg2[%c0_1, %c0_2] : memref<32x128xf32, #tpu.memory_space<vmem>>, vector<32x128xf32>
    %cst = arith.constant dense<0.000000e+00> : vector<8x128xf32>
    %2 = tpu.matmul %0, %1, %cst {dimension_numbers = #tpu.dot_dimension_numbers<[1], [0], [0], [1], [0, 0, 1, 1], [], []>} : vector<8x32xf32>, vector<32x128xf32>, vector<8x128xf32> -> vector<8x128xf32>
    %c0_3 = arith.constant 0 : index
    %c0_4 = arith.constant 0 : index
    %3 = vector.load %arg3[%c0_3, %c0_4] : memref<1x128xf32, #tpu.memory_space<vmem>>, vector<1x128xf32>
    %4 = vector.broadcast %3 : vector<1x128xf32> to vector<8x128xf32>
    %5 = arith.addf %2, %4 : vector<8x128xf32>
    %6 = arith.negf %5 : vector<8x128xf32>
    %7 = math.exp %6 : vector<8x128xf32>
    %cst_5 = arith.constant 1.000000e+00 : f32
    %8 = vector.broadcast %cst_5 : f32 to vector<8x128xf32>
    %9 = arith.addf %8, %7 : vector<8x128xf32>
    %10 = arith.divf %8, %9 : vector<8x128xf32>
    %c0_6 = arith.constant 0 : index
    %c0_7 = arith.constant 0 : index
    %11 = vector.load %arg4[%c0_6, %c0_7] : memref<128x128xf32, #tpu.memory_space<vmem>>, vector<128x128xf32>
    %cst_8 = arith.constant dense<0.000000e+00> : vector<8x128xf32>
    %12 = tpu.matmul %10, %11, %cst_8 {dimension_numbers = #tpu.dot_dimension_numbers<[1], [0], [0], [1], [0, 0, 1, 1], [], []>} : vector<8x128xf32>, vector<128x128xf32>, vector<8x128xf32> -> vector<8x128xf32>
    %c0_9 = arith.constant 0 : index
    %c0_10 = arith.constant 0 : index
    %13 = vector.load %arg5[%c0_9, %c0_10] : memref<1x128xf32, #tpu.memory_space<vmem>>, vector<1x128xf32>
    %14 = vector.broadcast %13 : vector<1x128xf32> to vector<8x128xf32>
    %15 = arith.addf %12, %14 : vector<8x128xf32>
    %16 = arith.negf %15 : vector<8x128xf32>
    %17 = math.exp %16 : vector<8x128xf32>
    %cst_11 = arith.constant 1.000000e+00 : f32
    %18 = vector.broadcast %cst_11 : f32 to vector<8x128xf32>
    %19 = arith.addf %18, %17 : vector<8x128xf32>
    %20 = arith.divf %18, %19 : vector<8x128xf32>
    %c0_12 = arith.constant 0 : index
    %c0_13 = arith.constant 0 : index
    %21 = vector.load %arg6[%c0_12, %c0_13] : memref<128x16xf32, #tpu.memory_space<vmem>>, vector<128x16xf32>
    %cst_14 = arith.constant dense<0.000000e+00> : vector<8x16xf32>
    %22 = tpu.matmul %20, %21, %cst_14 {dimension_numbers = #tpu.dot_dimension_numbers<[1], [0], [0], [1], [0, 0, 1, 1], [], []>} : vector<8x128xf32>, vector<128x16xf32>, vector<8x16xf32> -> vector<8x16xf32>
    %c0_15 = arith.constant 0 : index
    %c0_16 = arith.constant 0 : index
    %23 = vector.load %arg7[%c0_15, %c0_16] : memref<1x16xf32, #tpu.memory_space<vmem>>, vector<1x16xf32>
    %24 = vector.broadcast %23 : vector<1x16xf32> to vector<8x16xf32>
    %25 = arith.addf %22, %24 : vector<8x16xf32>
    %c0_17 = arith.constant 0 : index
    %c0_18 = arith.constant 0 : index
    %26 = vector.load %arg8[%c0_17, %c0_18] : memref<8x16xf32, #tpu.memory_space<vmem>>, vector<8x16xf32>
    tpu.vector_store %arg8[%c0_17, %c0_18], %25 {strides = array<i32>} : memref<8x16xf32, #tpu.memory_space<vmem>>, vector<8x16xf32>,
    return
  }
  func.func @transform_0(%arg0: i32) -> (i32, i32) {
    %c0_i32 = arith.constant 0 : i32
    %c0_i32_0 = arith.constant 0 : i32
    return %arg0, %c0_i32 : i32, i32
  }
  func.func @transform_1(%arg0: i32) -> (i32, i32) {
    %c0_i32 = arith.constant 0 : i32
    %c0_i32_0 = arith.constant 0 : i32
    %c0_i32_1 = arith.constant 0 : i32
    return %c0_i32, %c0_i32_0 : i32, i32
  }
  func.func @transform_2(%arg0: i32) -> (i32, i32) {
    %c0_i32 = arith.constant 0 : i32
    %c0_i32_0 = arith.constant 0 : i32
    %c0_i32_1 = arith.constant 0 : i32
    return %c0_i32, %c0_i32_0 : i32, i32
  }
  func.func @transform_3(%arg0: i32) -> (i32, i32) {
    %c0_i32 = arith.constant 0 : i32
    %c0_i32_0 = arith.constant 0 : i32
    %c0_i32_1 = arith.constant 0 : i32
    return %c0_i32, %c0_i32_0 : i32, i32
  }
  func.func @transform_4(%arg0: i32) -> (i32, i32) {
    %c0_i32 = arith.constant 0 : i32
    %c0_i32_0 = arith.constant 0 : i32
    %c0_i32_1 = arith.constant 0 : i32
    return %c0_i32, %c0_i32_0 : i32, i32
  }
  func.func @transform_5(%arg0: i32) -> (i32, i32) {
    %c0_i32 = arith.constant 0 : i32
    %c0_i32_0 = arith.constant 0 : i32
    %c0_i32_1 = arith.constant 0 : i32
    return %c0_i32, %c0_i32_0 : i32, i32
  }
  func.func @transform_6(%arg0: i32) -> (i32, i32) {
    %c0_i32 = arith.constant 0 : i32
    %c0_i32_0 = arith.constant 0 : i32
    %c0_i32_1 = arith.constant 0 : i32
    return %c0_i32, %c0_i32_0 : i32, i32
  }
  func.func @transform_7(%arg0: i32) -> (i32, i32) {
    %c0_i32 = arith.constant 0 : i32
    %c0_i32_0 = arith.constant 0 : i32
    return %arg0, %c0_i32 : i32, i32
  }
}

</mosaic_0001>

<llo_original>
// kernel: _lambda_.1
$region0: #{_lambda_.1}
  #allocation0 [shape = 'u32[]', space=smem, size = 0x4, offset = 0x4, fixed_abs, tag = 'smem constant byte address 0x4 - core index']
  #allocation1 [shape = 'u32[72,128]{1,0:T(1,128)}', space=vmem, size = 0x9000, scoped, tag = 'internal scratch']
  %s0 = inlined_call_operand.hbm [shape: f32[8,32], index: 0, kind: input, shape index: {}]
  %s1 = inlined_call_operand.hbm [shape: f32[32,128], index: 1, kind: input, shape index: {}]
  %s2 = inlined_call_operand.vmem [shape: f32[1,128], index: 2, kind: input, shape index: {}, may-alias: {2,4}]
  %s3 = inlined_call_operand.hbm [shape: f32[128,128], index: 3, kind: input, shape index: {}]
  %s4 = inlined_call_operand.vmem [shape: f32[1,128], index: 4, kind: input, shape index: {}, may-alias: {2,4}]
  %s5 = inlined_call_operand.hbm [shape: f32[128,16], index: 5, kind: input, shape index: {}]
  %s6 = inlined_call_operand.vmem [shape: f32[1,16], index: 6, kind: input, shape index: {}]
  %s7 = inlined_call_operand.hbm [shape: f32[8,16], index: 7, kind: output, shape index: {}]
  %s8 = sld [smem:[#allocation0]]
  $region54: #{_lambda_.1} parent=0
    _
  %s10 = ssub.s32 1, %s8
  %s11 = scalar_select 0, %s10, %s8
  $region1: #{_lambda_.1} parent=0
    #allocation2 [shape = 'u8[4096]{0}', space=vmem, size = 0x1000, scoped, tag = 'input window, operand 0, single buffered']
    #allocation3 [shape = 's32[1]{0}', space=sflag, size = 0x4, scoped, tag = 'scoped memory for _lambda_.1']
    #allocation4 [shape = 's32[1]{0}', space=sflag, size = 0x4, scoped, tag = 'scoped memory for _lambda_.1']
    #allocation5 [shape = 'u8[16384]{0}', space=vmem, size = 0x4000, scoped, tag = 'input window, operand 1, single buffered']
    #allocation6 [shape = 's32[1]{0}', space=sflag, size = 0x4, scoped, tag = 'scoped memory for _lambda_.1']
    #allocation7 [shape = 'u8[65536]{0}', space=vmem, size = 0x10000, scoped, tag = 'input window, operand 3, single buffered']
    #allocation8 [shape = 'u8[65536]{0}', space=vmem, size = 0x10000, scoped, tag = 'input window, operand 5, single buffered']
    #allocation9 [shape = 's32[1]{0}', space=sflag, size = 0x4, scoped, tag = 'scoped memory for _lambda_.1']
    #allocation10 [shape = 'u8[4096]{0}', space=vmem, size = 0x1000, scoped, tag = 'output window, operand 0, single buffered']
    %12 = vsyncpa [#allocation3], 0
    %13 = vsyncpa [#allocation6], 0
    %14 = vsyncpa [#allocation9], 0
    %15 = vsyncpa [#allocation4], 0
    // Predicated region
    $region2: #{_lambda_.1} parent=1 // pred_check
      _
    $region3: #{_lambda_.1} parent=1 // pred_check_branch
      %17 = sbr.rel (0) target = $region5
    $region4: #{_lambda_.1} parent=1 // pred_region
      %19 = vsyncadd [#allocation3], 0
      %s21 = sshll.u32 %s0, 4
      %s22 = int_to_ptr.hbm [resolvable:$true] %s21
      %s23 = sshll.u32 [#allocation2], 4
      %s24 = int_to_ptr.vmem [resolvable:$true] %s23
      %26 = dma.hbm_to_vmem [thread:$0]  %s22, 128, %s24, [#allocation3]
    $region5: #{_lambda_.1} parent=1 // pred_fallthru
      _
    // Predicated region
    $region6: #{_lambda_.1} parent=1 // pred_check
      _
    $region7: #{_lambda_.1} parent=1 // pred_check_branch
      %28 = sbr.rel (0) target = $region9
    $region8: #{_lambda_.1} parent=1 // pred_region
      %30 = vsyncadd [#allocation6], 0
      %s31 = sshll.u32 %s1, 4
      %s32 = int_to_ptr.hbm [resolvable:$true] %s31
      %s33 = sshll.u32 [#allocation5], 4
      %s34 = int_to_ptr.vmem [resolvable:$true] %s33
      %39 = dma.hbm_to_vmem [thread:$0]  %s32, 512, %s34, [#allocation6], 128, 128, 8
    $region9: #{_lambda_.1} parent=1 // pred_fallthru
      _
    // Predicated region
    $region10: #{_lambda_.1} parent=1 // pred_check
      _
    $region11: #{_lambda_.1} parent=1 // pred_check_branch
      %41 = sbr.rel (0) target = $region13
    $region12: #{_lambda_.1} parent=1 // pred_region
      _
    $region13: #{_lambda_.1} parent=1 // pred_fallthru
      _
    // Predicated region
    $region14: #{_lambda_.1} parent=1 // pred_check
      _
    $region15: #{_lambda_.1} parent=1 // pred_check_branch
      %43 = sbr.rel (0) target = $region17
    $region16: #{_lambda_.1} parent=1 // pred_region
      %45 = vsyncadd [#allocation6], 0
      %s46 = sshll.u32 %s3, 4
      %s47 = int_to_ptr.hbm [resolvable:$true] %s46
      %s48 = sshll.u32 [#allocation7], 4
      %s49 = int_to_ptr.vmem [resolvable:$true] %s48
      %54 = dma.hbm_to_vmem [thread:$0]  %s47, 2048, %s49, [#allocation6], 128, 128, 8
    $region17: #{_lambda_.1} parent=1 // pred_fallthru
      _
    // Predicated region
    $region18: #{_lambda_.1} parent=1 // pred_check
      _
    $region19: #{_lambda_.1} parent=1 // pred_check_branch
      %56 = sbr.rel (0) target = $region21
    $region20: #{_lambda_.1} parent=1 // pred_region
      _
    $region21: #{_lambda_.1} parent=1 // pred_fallthru
      _
    // Predicated region
    $region22: #{_lambda_.1} parent=1 // pred_check
      _
    $region23: #{_lambda_.1} parent=1 // pred_check_branch
      %58 = sbr.rel (0) target = $region25
    $region24: #{_lambda_.1} parent=1 // pred_region
      %60 = vsyncadd [#allocation9], 0
      %s61 = sshll.u32 %s5, 4
      %s62 = int_to_ptr.hbm [resolvable:$true] %s61
      %s63 = sshll.u32 [#allocation8], 4
      %s64 = int_to_ptr.vmem [resolvable:$true] %s63
      %69 = dma.hbm_to_vmem [thread:$0]  %s62, 2048, %s64, [#allocation9], 128, 128, 8
    $region25: #{_lambda_.1} parent=1 // pred_fallthru
      _
    // Predicated region
    $region26: #{_lambda_.1} parent=1 // pred_check
      _
    $region27: #{_lambda_.1} parent=1 // pred_check_branch
      %71 = sbr.rel (0) target = $region29
    $region28: #{_lambda_.1} parent=1 // pred_region
      _
    $region29: #{_lambda_.1} parent=1 // pred_fallthru
      _
    // Predicated region
    $region30: #{_lambda_.1} parent=1 // pred_check
      _
    $region31: #{_lambda_.1} parent=1 // pred_check_branch
      %73 = sbr.rel (0) target = $region33
    $region32: #{_lambda_.1} parent=1 // pred_region
      %75 = dma.done [#allocation3], 128
    $region33: #{_lambda_.1} parent=1 // pred_fallthru
      _
    // Predicated region
    $region34: #{_lambda_.1} parent=1 // pred_check
      _
    $region35: #{_lambda_.1} parent=1 // pred_check_branch
      %77 = sbr.rel (0) target = $region37
    $region36: #{_lambda_.1} parent=1 // pred_region
      %79 = dma.done [#allocation6], 512
    $region37: #{_lambda_.1} parent=1 // pred_fallthru
      _
    // Predicated region
    $region38: #{_lambda_.1} parent=1 // pred_check
      _
    $region39: #{_lambda_.1} parent=1 // pred_check_branch
      %81 = sbr.rel (0) target = $region41
    $region40: #{_lambda_.1} parent=1 // pred_region
      %83 = dma.done [#allocation6], 2048
    $region41: #{_lambda_.1} parent=1 // pred_fallthru
      _
    // Predicated region
    $region42: #{_lambda_.1} parent=1 // pred_check
      _
    $region43: #{_lambda_.1} parent=1 // pred_check_branch
      %85 = sbr.rel (0) target = $region45
    $region44: #{_lambda_.1} parent=1 // pred_region
      %87 = dma.done [#allocation9], 2048
    $region45: #{_lambda_.1} parent=1 // pred_fallthru
      _
    %v88 = vld [vmem:[#allocation2] sm:$0xff]
    %v89 = vld [vmem:[#allocation5] sm:$0xff]
    %v90 = vld [vmem:[#allocation5 + $0x8] sm:$0xff]
    %v91 = vld [vmem:[#allocation5 + $0x10] sm:$0xff]
    %v92 = vld [vmem:[#allocation5 + $0x18] sm:$0xff]
    %v93 = vld [vmem:[%s2] sm:$0x1]
    %v95 = vperm.slane %v93, 0
    %vm97 = vcmask 261120
    %v99 = vsel %vm97, %v88, 0
    %101 = vmatpush.msra.mxu0 0.0
    %102 = vmatpush.msra.mxu0 0.0
    %103 = vmatpush.msra.mxu0 0.0
    %104 = vmatpush.msra.mxu0 0.0
    %105 = vmatpush.msra.mxu0 0.0
    %106 = vmatpush.msra.mxu0 0.0
    %107 = vmatpush.msra.mxu0 0.0
    %108 = vmatpush.msra.mxu0 0.0
    %109 = vmatpush.msra.mxu0 0.0
    %110 = vmatpush.msra.mxu0 0.0
    %111 = vmatpush.msra.mxu0 0.0
    %112 = vmatpush.msra.mxu0 0.0
    %113 = vmatpush.msra.mxu0 %v92
    %114 = vmatpush.msra.mxu0 %v91
    %115 = vmatpush.msra.mxu0 %v90
    %116 = vmatpush.msra.mxu0 %v89
    %117 = vmatmul.f32.gmra.mxu0 %v99
    %v118 = vpop.f32.mrf.mxu0
    %v119 = vadd.f32 %v95, %v118
    %120 = vdwg.mxu0
    %v121 = vxor.u32 %v119, 2147483648
    %v122 = vmul.f32 %v121, 1.442695
    %v123 = vpow.pop %v122
    %v124 = vadd.f32 %v123, 1.0
    %v125 = vrcp.pop %v124
    %v126 = vmul.f32 %v124, %v125
    %v127 = vsub.f32 1.0, %v126
    %v128 = vmul.f32 %v125, %v127
    %v129 = vadd.f32 %v125, %v128
    %vm130 = vweird.f32 %v124
    %vm131 = vweird.f32 %v125
    %vm132 = vmor %vm130, %vm131
    %v133 = vsel %vm132, %v125, %v129
    %v134 = vand.u32 2147483647, %v124
    %vm135 = vcmp.eq.f32.partialorder %v134, 8.507059e+37
    %v136 = vand.u32 %v124, 2147483648
    %v137 = vor.u32 1.1754944e-38, %v136
    %v138 = vsel %vm135, %v137, %v133
    %v139 = vmul.f32 1.0, %v138
    %v140 = vld [vmem:[#allocation7] sm:$0xff]
    %v141 = vld [vmem:[#allocation7 + $0x8] sm:$0xff]
    %v142 = vld [vmem:[#allocation7 + $0x10] sm:$0xff]
    %v143 = vld [vmem:[#allocation7 + $0x18] sm:$0xff]
    %v144 = vld [vmem:[#allocation7 + $0x20] sm:$0xff]
    %v145 = vld [vmem:[#allocation7 + $0x28] sm:$0xff]
    %v146 = vld [vmem:[#allocation7 + $0x30] sm:$0xff]
    %v147 = vld [vmem:[#allocation7 + $0x38] sm:$0xff]
    %v148 = vld [vmem:[#allocation7 + $0x40] sm:$0xff]
    %v149 = vld [vmem:[#allocation7 + $0x48] sm:$0xff]
    %v150 = vld [vmem:[#allocation7 + $0x50] sm:$0xff]
    %v151 = vld [vmem:[#allocation7 + $0x58] sm:$0xff]
    %v152 = vld [vmem:[#allocation7 + $0x60] sm:$0xff]
    %v153 = vld [vmem:[#allocation7 + $0x68] sm:$0xff]
    %v154 = vld [vmem:[#allocation7 + $0x70] sm:$0xff]
    %v155 = vld [vmem:[#allocation7 + $0x78] sm:$0xff]
    %v156 = vld [vmem:[%s4] sm:$0x1]
    %v158 = vperm.slane %v156, 0
    %160 = vmatpush.msra.mxu0 %v155
    %161 = vmatpush.msra.mxu0 %v154
    %162 = vmatpush.msra.mxu0 %v153
    %163 = vmatpush.msra.mxu0 %v152
    %164 = vmatpush.msra.mxu0 %v151
    %165 = vmatpush.msra.mxu0 %v150
    %166 = vmatpush.msra.mxu0 %v149
    %167 = vmatpush.msra.mxu0 %v148
    %168 = vmatpush.msra.mxu0 %v147
    %169 = vmatpush.msra.mxu0 %v146
    %170 = vmatpush.msra.mxu0 %v145
    %171 = vmatpush.msra.mxu0 %v144
    %172 = vmatpush.msra.mxu0 %v143
    %173 = vmatpush.msra.mxu0 %v142
    %174 = vmatpush.msra.mxu0 %v141
    %175 = vmatpush.msra.mxu0 %v140
    %176 = vmatmul.f32.gmra.mxu0 %v139
    %v177 = vpop.f32.mrf.mxu0
    %v178 = vadd.f32 %v158, %v177
    %179 = vdwg.mxu0
    %v180 = vxor.u32 %v178, 2147483648
    %v181 = vmul.f32 %v180, 1.442695
    %v182 = vpow.pop %v181
    %v183 = vadd.f32 %v182, 1.0
    %v184 = vrcp.pop %v183
    %v185 = vmul.f32 %v183, %v184
    %v186 = vsub.f32 1.0, %v185
    %v187 = vmul.f32 %v184, %v186
    %v188 = vadd.f32 %v184, %v187
    %vm189 = vweird.f32 %v183
    %vm190 = vweird.f32 %v184
    %vm191 = vmor %vm189, %vm190
    %v192 = vsel %vm191, %v184, %v188
    %v193 = vand.u32 2147483647, %v183
    %vm194 = vcmp.eq.f32.partialorder %v193, 8.507059e+37
    %v195 = vand.u32 %v183, 2147483648
    %v196 = vor.u32 1.1754944e-38, %v195
    %v197 = vsel %vm194, %v196, %v192
    %v198 = vmul.f32 1.0, %v197
    %v199 = vld [vmem:[#allocation8] sm:$0xff]
    %v200 = vld [vmem:[#allocation8 + $0x8] sm:$0xff]
    %v201 = vld [vmem:[#allocation8 + $0x10] sm:$0xff]
    %v202 = vld [vmem:[#allocation8 + $0x18] sm:$0xff]
    %v203 = vld [vmem:[#allocation8 + $0x20] sm:$0xff]
    %v204 = vld [vmem:[#allocation8 + $0x28] sm:$0xff]
    %v205 = vld [vmem:[#allocation8 + $0x30] sm:$0xff]
    %v206 = vld [vmem:[#allocation8 + $0x38] sm:$0xff]
    %v207 = vld [vmem:[#allocation8 + $0x40] sm:$0xff]
    %v208 = vld [vmem:[#allocation8 + $0x48] sm:$0xff]
    %v209 = vld [vmem:[#allocation8 + $0x50] sm:$0xff]
    %v210 = vld [vmem:[#allocation8 + $0x58] sm:$0xff]
    %v211 = vld [vmem:[#allocation8 + $0x60] sm:$0xff]
    %v212 = vld [vmem:[#allocation8 + $0x68] sm:$0xff]
    %v213 = vld [vmem:[#allocation8 + $0x70] sm:$0xff]
    %v214 = vld [vmem:[#allocation8 + $0x78] sm:$0xff]
    %v215 = vld [vmem:[%s6] sm:$0x1]
    %v217 = vperm.slane %v215, 0
    %219 = vmatpush.msra.mxu0 %v214
    %220 = vmatpush.msra.mxu0 %v213
    %221 = vmatpush.msra.mxu0 %v212
    %222 = vmatpush.msra.mxu0 %v211
    %223 = vmatpush.msra.mxu0 %v210
    %224 = vmatpush.msra.mxu0 %v209
    %225 = vmatpush.msra.mxu0 %v208
    %226 = vmatpush.msra.mxu0 %v207
    %227 = vmatpush.msra.mxu0 %v206
    %228 = vmatpush.msra.mxu0 %v205
    %229 = vmatpush.msra.mxu0 %v204
    %230 = vmatpush.msra.mxu0 %v203
    %231 = vmatpush.msra.mxu0 %v202
    %232 = vmatpush.msra.mxu0 %v201
    %233 = vmatpush.msra.mxu0 %v200
    %234 = vmatpush.msra.mxu0 %v199
    %235 = vmatmul.f32.gmra.mxu0 %v198
    %v236 = vpop.f32.mrf.mxu0
    %v237 = vadd.f32 %v217, %v236
    %238 = vdwg.mxu0
    %vm239 = vcmask 130048
    %240 = vst.msk [vmem:[#allocation10] sm:$0xff] %vm239, %v237
    // Predicated region
    $region46: #{_lambda_.1} parent=1 // pred_check
      _
    $region47: #{_lambda_.1} parent=1 // pred_check_branch
      %242 = sbr.rel (0) target = $region49
    $region48: #{_lambda_.1} parent=1 // pred_region
      %244 = vsyncadd [#allocation4], 0
      %s246 = sshll.u32 [#allocation10], 4
      %s247 = int_to_ptr.vmem [resolvable:$true] %s246
      %s248 = sshll.u32 %s7, 4
      %s249 = int_to_ptr.hbm [resolvable:$true] %s248
      %251 = dma.vmem_to_hbm [thread:$0]  %s247, 128, %s249, [#allocation4]
    $region49: #{_lambda_.1} parent=1 // pred_fallthru
      _
    // Predicated region
    $region50: #{_lambda_.1} parent=1 // pred_check
      _
    $region51: #{_lambda_.1} parent=1 // pred_check_branch
      %253 = sbr.rel (0) target = $region53
    $region52: #{_lambda_.1} parent=1 // pred_region
      %255 = dma.done [#allocation4], 128
    $region53: #{_lambda_.1} parent=1 // pred_fallthru
      _
    %256 = vsyncpa [#allocation3], 1
    %257 = vsyncpa [#allocation6], 1
    %258 = vsyncpa [#allocation9], 1
    %259 = vsyncpa [#allocation4], 1

</llo_original>
